<compile_context>
chip_gen: v7x
topology: tpu7x:2x2x1
jax: 0.10.0
libtpu: 0.0.40
codegen_flags: <defaults>
</compile_context>

<pallas_src>
import numpy as np
import jax
import jax.numpy as jnp
from jax.experimental import pallas as pl
from jax.experimental.pallas import tpu as pltpu

# ----------------------------- config (args) ---------------------------------
D = 768              # hard-coded in the module (self.D = 768)
RE_TAG_DIM = 16      # args.re_tag_dim
LABEL_SIZE = 8       # label_size (use_crf=False -> no +2)
EPS = 1e-5           # self.epsilon
NC = 16              # packed width: scores 0..7 | loss 8 | pred 9 | zeros 10..15
MAX_TM = 2048        # token tile cap (bf16 x tile = 3 MiB; total ~20 MiB w/ buffers)
NEG = -1e30          # mask value for padded score columns
VMEM_LIMIT_BYTES = 40 * 1024 * 1024   # explicit: > v5e's 16 MiB default, < v7x's 64 MiB


def _round_up(x, m):
    return ((x + m - 1) // m) * m


# ------------------------------ Pallas kernel --------------------------------
def bert_sf_kernel(x_ref, rt_ref, lbl_ref, wd_ref, b_ref, tw_ref, out_ref):
    x = x_ref[...]                                      # (TM, D)  bf16
    rt = rt_ref[...]                                    # (TM, 8)  f32
    lbl = lbl_ref[...]                                  # (TM, 1)  i32

    # ---- tag marry-up, folded:
    #   (rt @ (tag_embed @ W_t)) / max(sum(rt), eps)  +  rt @ diag(logits_w)
    # tw_ref rows 0..7  = tag_embed @ W_t  (padded to 16 cols with zeros)
    # tw_ref rows 8..15 = diag(logits_weights) (padded to 16 cols with zeros)
    denom = jnp.maximum(jnp.sum(rt, axis=-1, keepdims=True), EPS)       # (TM,1)
    tag_term = (jnp.dot(rt, tw_ref[:LABEL_SIZE, :],
                        preferred_element_type=jnp.float32) / denom
                + jnp.dot(rt, tw_ref[LABEL_SIZE:, :],
                          preferred_element_type=jnp.float32))          # (TM,NC)

    # ---- big bf16 matmul (f32 accumulation) + tag path + bias.
    # Columns 8..15 are exactly 0 because all weights/bias are zero-padded.
    scores = (jnp.dot(x, wd_ref[...], preferred_element_type=jnp.float32)
              + tag_term
              + b_ref[...])                                             # (TM,NC)

    col = jax.lax.broadcasted_iota(jnp.int32, scores.shape, 1)          # (TM,NC)
    masked = jnp.where(col < LABEL_SIZE, scores, jnp.float32(NEG))

    # ---- per-token CE loss: logsumexp(scores) - scores[label]
    m = jnp.max(masked, axis=-1, keepdims=True)
    lse = m + jnp.log(jnp.sum(jnp.exp(masked - m), axis=-1, keepdims=True))
    true_s = jnp.sum(jnp.where(col == lbl, masked, 0.0), axis=-1, keepdims=True)
    tok_loss = lse - true_s                                             # (TM,1)

    # ---- per-token argmax (first-occurrence semantics)
    idx = jnp.where(masked == m, col, jnp.int32(NC))
    pred = jnp.min(idx, axis=-1, keepdims=True).astype(jnp.float32)     # (TM,1)

    # ---- packed output: [scores(0..7) | loss(8) | pred(9) | 0(10..15)]
    packed = jnp.where(col == LABEL_SIZE, tok_loss, scores)
    packed = jnp.where(col == LABEL_SIZE + 1, pred, packed)
    out_ref[...] = packed


def bert_sf_scores_call(x_flat, rt_flat, lbl_flat, wd_pad, b_pad, tag_w):
    n_tok = x_flat.shape[0]
    # Never collapse to a single grid step (keeps both v7x TensorCores busy on
    # the "parallel" axis); cap the tile at MAX_TM; keep tm a multiple of 16 so
    # the bf16 x block honours the (16,128) sublane tiling.
    half = (n_tok + 1) // 2
    tm = min(MAX_TM, _round_up(max(half, 1), 16))
    grid = (pl.cdiv(n_tok, tm),)
    return pl.pallas_call(
        bert_sf_kernel,
        out_shape=jax.ShapeDtypeStruct((n_tok, NC), jnp.float32),
        grid_spec=pltpu.PrefetchScalarGridSpec(
            num_scalar_prefetch=0,
            grid=grid,
            in_specs=[
                pl.BlockSpec((tm, D), lambda i: (i, 0)),                 # x (bf16)
                pl.BlockSpec((tm, LABEL_SIZE), lambda i: (i, 0)),        # re_tags (f32)
                pl.BlockSpec((tm, 1), lambda i: (i, 0)),                 # labels (i32)
                pl.BlockSpec((D, NC), lambda i: (0, 0)),                 # W_d (bf16, padded)
                pl.BlockSpec((1, NC), lambda i: (0, 0)),                 # bias (f32, padded)
                pl.BlockSpec((2 * LABEL_SIZE, NC), lambda i: (0, 0)),    # [E@Wt ; diag(lw)]
            ],
            out_specs=pl.BlockSpec((tm, NC), lambda i: (i, 0)),
        ),
        compiler_params=pltpu.CompilerParams(
            dimension_semantics=("parallel",),
            vmem_limit_bytes=VMEM_LIMIT_BYTES,
        ),
    )(x_flat, rt_flat, lbl_flat, wd_pad, b_pad, tag_w)


# ------------------------------ python wrapper --------------------------------
def bert_sf_forward(inputs, re_tags, labels, lengths, params):
    """Mirrors Bert_SF.forward (train=True, marryup_type='all', use_crf=False).

    inputs : (B, Lmax, D) bf16 (preferred) or f32 -- output of BertEmbedding
    re_tags: (B, Lmax, C) f32
    labels : (B, Lmax)    i32
    lengths: (B,)         i32 (concrete)
    returns (loss, pred_labels, flattened_true_label, flat_scores)
    """
    B, Lmax, d_in = inputs.shape
    assert d_in == D
    n_tok = B * Lmax

    # Free row-major reshapes; x stays bf16 when the caller already provides it
    # (recommended -- a wrapper-side f32->bf16 cast is an extra HBM pass).
    x_flat = inputs.reshape(n_tok, D)
    if x_flat.dtype != jnp.bfloat16:
        x_flat = x_flat.astype(jnp.bfloat16)
    rt_flat = re_tags.reshape(n_tok, LABEL_SIZE).astype(jnp.float32)
    lbl_flat = labels.reshape(n_tok, 1).astype(jnp.int32)

    # Tiny parameter pre-folds (done once, outside the mem-bound kernel).
    f32 = jnp.float32
    m_fold = params["re_tag_embed"].astype(f32) @ params["w_t"].astype(f32)   # (C, C)
    lw = params["logits_weights"].reshape(-1).astype(f32)
    tag_w = jnp.zeros((2 * LABEL_SIZE, NC), f32)
    tag_w = tag_w.at[:LABEL_SIZE, :LABEL_SIZE].set(m_fold)
    tag_w = tag_w.at[LABEL_SIZE + jnp.arange(LABEL_SIZE),
                     jnp.arange(LABEL_SIZE)].set(lw)
    wd_pad = (jnp.zeros((D, NC), jnp.bfloat16)
              .at[:, :LABEL_SIZE].set(params["w_d"].astype(jnp.bfloat16)))
    b_pad = jnp.zeros((1, NC), f32).at[:, :LABEL_SIZE].set(params["bias"].astype(f32))

    packed = bert_sf_scores_call(x_flat, rt_flat, lbl_flat, wd_pad, b_pad, tag_w)

    # flatten(..., lengths): keep valid positions in row-major (b, t) order.
    lengths_np = np.asarray(lengths)
    mask = (np.arange(Lmax)[None, :] < lengths_np[:, None]).reshape(-1)
    valid_idx = np.nonzero(mask)[0]

    flat_scores = packed[valid_idx, :LABEL_SIZE]                 # (sum(len), C)
    loss = jnp.mean(packed[valid_idx, LABEL_SIZE])               # nn.CrossEntropyLoss
    pred_labels = packed[valid_idx, LABEL_SIZE + 1].astype(jnp.int32)
    flat_true = lbl_flat[valid_idx, 0]
    return loss, pred_labels, flat_true, flat_scores


# ------------------------------ pure-JAX reference ----------------------------
def reference(inputs, re_tags, labels, lengths, params):
    """Pure-JAX reference with the same bf16 quantization of the x @ W_d path."""
    B, Lmax, _ = inputs.shape
    lengths_np = np.asarray(lengths)
    x2 = inputs.reshape(-1, D).astype(jnp.bfloat16)
    x_part = jnp.dot(x2, params["w_d"].astype(jnp.bfloat16),
                     preferred_element_type=jnp.float32).reshape(B, Lmax, LABEL_SIZE)
    emb = jnp.einsum("blc,cd->bld", re_tags, params["re_tag_embed"])
    emb = emb / jnp.maximum(re_tags.sum(-1, keepdims=True), EPS)
    tag_part = jnp.einsum("bld,dc->blc", emb, params["w_t"])
    scores = x_part + tag_part + params["bias"][0]
    scores = scores + re_tags * params["logits_weights"][0]
    mask = (np.arange(Lmax)[None, :] < lengths_np[:, None]).reshape(-1)
    valid_idx = np.nonzero(mask)[0]
    C = scores.shape[-1]
    flat_scores = scores.reshape(-1, C)[valid_idx]
    flat_lbl = labels.reshape(-1)[valid_idx]
    logp = jax.nn.log_softmax(flat_scores, axis=-1)
    loss = -jnp.mean(logp[jnp.arange(flat_lbl.shape[0]), flat_lbl])
    preds = jnp.argmax(flat_scores, axis=-1)
    return loss, preds, flat_lbl, flat_scores


# ----------------------------------- main --------------------------------------
if __name__ == "__main__":
    key = jax.random.PRNGKey(0)
    k1, k2, k3, k4, k5, k6, k7 = jax.random.split(key, 7)

    B, Lmax = 2, 16
    lengths = np.array([16, 11], dtype=np.int32)

    # "BertEmbedding" output (synthetic), produced in bf16 upstream; re_tags
    # (non-negative soft tags) and labels.
    inputs = jax.random.normal(k1, (B, Lmax, D), dtype=jnp.float32).astype(jnp.bfloat16)
    re_tags = jax.random.uniform(k2, (B, Lmax, LABEL_SIZE), dtype=jnp.float32)
    labels = jax.random.randint(k3, (B, Lmax), 0, LABEL_SIZE, dtype=jnp.int32)

    # deterministic parameter init (shapes from Bert_SF.__init__)
    re_tag_embed = jax.random.normal(k4, (LABEL_SIZE, RE_TAG_DIM), dtype=jnp.float32)
    logits_weights = jax.random.normal(k5, (1, LABEL_SIZE), dtype=jnp.float32)
    input_dim = D + RE_TAG_DIM                        # marryup_type in ['all','input']
    w_lin = jax.random.normal(k6, (input_dim, LABEL_SIZE), dtype=jnp.float32) * 0.02
    bias = jax.random.normal(k7, (1, LABEL_SIZE), dtype=jnp.float32) * 0.02

    params = {
        "re_tag_embed": re_tag_embed,
        "logits_weights": logits_weights,
        "w_d": w_lin[:D, :],           # weight split: embeddings part
        "w_t": w_lin[D:, :],           # weight split: tag-embedding part
        "bias": bias,
    }

    loss, preds, true_lbl, flat_scores = bert_sf_forward(
        inputs, re_tags, labels, lengths, params)
    jax.block_until_ready((loss, preds, true_lbl, flat_scores))

    # ---------------------------- correctness checks ---------------------------
    rloss, rpreds, rlbl, rscores = reference(inputs, re_tags, labels, lengths, params)

    ks = np.asarray(flat_scores)
    rs = np.asarray(rscores)
    # bf16 x @ W_d path: tolerance accounts for MXU accumulation-order differences.
    np.testing.assert_allclose(ks, rs, rtol=2e-3, atol=2e-3)
    np.testing.assert_allclose(float(loss), float(rloss), rtol=2e-3, atol=2e-3)
    np.testing.assert_array_equal(np.asarray(true_lbl), np.asarray(rlbl))

    # argmax: must be consistent with the kernel's own scores (exact), and match
    # the reference except where scores are numerically tied.
    kpred = np.asarray(preds)
    np.testing.assert_array_equal(kpred, np.argmax(ks, axis=-1))
    rpred = np.asarray(rpreds)
    mism = kpred != rpred
    if mism.any():
        rows = np.arange(len(kpred))
        gaps = np.abs(ks[rows, kpred] - ks[rows, rpred])
        assert np.all(gaps[mism] < 2e-3), "argmax mismatch beyond numerical tie"

    print("KERNEL_OK")
</pallas_src>

<mosaic_0001>
module attributes {stable_mosaic.version = 11 : i64} {
  func.func @bert_sf_kernel(%arg0: i32, %arg1: memref<16x768xbf16, #tpu.memory_space<vmem>>, %arg2: memref<16x8xf32, #tpu.memory_space<vmem>>, %arg3: memref<16x1xi32, #tpu.memory_space<vmem>>, %arg4: memref<768x16xbf16, #tpu.memory_space<vmem>>, %arg5: memref<1x16xf32, #tpu.memory_space<vmem>>, %arg6: memref<16x16xf32, #tpu.memory_space<vmem>>, %arg7: memref<16x16xf32, #tpu.memory_space<vmem>>) attributes {dimension_semantics = [#tpu.dimension_semantics<parallel>], iteration_bounds = array<i64: 2>, scalar_prefetch = 0 : i64, scratch_operands = 0 : i64, tpu.core_type = #tpu.core_type<tc>, window_params = [{transform_indices = @transform_0, window_bounds = array<i64: 16, 768>}, {transform_indices = @transform_1, window_bounds = array<i64: 16, 8>}, {transform_indices = @transform_2, window_bounds = array<i64: 16, 1>}, {pipeline_mode = #tpu.pipeline_mode<synchronous>, transform_indices = @transform_3, window_bounds = array<i64: 768, 16>}, {pipeline_mode = #tpu.pipeline_mode<synchronous>, transform_indices = @transform_4, window_bounds = array<i64: 1, 16>}, {pipeline_mode = #tpu.pipeline_mode<synchronous>, transform_indices = @transform_5, window_bounds = array<i64: 16, 16>}, {transform_indices = @transform_6, window_bounds = array<i64: 16, 16>}]} {
    %c0 = arith.constant 0 : index
    %c0_0 = arith.constant 0 : index
    %0 = vector.load %arg1[%c0, %c0_0] : memref<16x768xbf16, #tpu.memory_space<vmem>>, vector<16x768xbf16>
    %c0_1 = arith.constant 0 : index
    %c0_2 = arith.constant 0 : index
    %1 = vector.load %arg2[%c0_1, %c0_2] : memref<16x8xf32, #tpu.memory_space<vmem>>, vector<16x8xf32>
    %c0_3 = arith.constant 0 : index
    %c0_4 = arith.constant 0 : index
    %2 = vector.load %arg3[%c0_3, %c0_4] : memref<16x1xi32, #tpu.memory_space<vmem>>, vector<16x1xi32>
    %cst = arith.constant dense<0.000000e+00> : vector<16xf32>
    %3 = vector.multi_reduction <add>, %1, %cst [1] : vector<16x8xf32> to vector<16xf32>
    %4 = vector.shape_cast %3 : vector<16xf32> to vector<16x1xf32>
    %cst_5 = arith.constant 9.99999974E-6 : f32
    %5 = vector.broadcast %cst_5 : f32 to vector<16x1xf32>
    %6 = arith.maximumf %4, %5 : vector<16x1xf32>
    %c0_6 = arith.constant 0 : index
    %c0_7 = arith.constant 0 : index
    %7 = vector.load %arg6[%c0_6, %c0_7] : memref<16x16xf32, #tpu.memory_space<vmem>>, vector<8x16xf32>
    %cst_8 = arith.constant dense<0.000000e+00> : vector<16x16xf32>
    %8 = tpu.matmul %1, %7, %cst_8 {dimension_numbers = #tpu.dot_dimension_numbers<[1], [0], [0], [1], [0, 0, 1, 1], [], []>} : vector<16x8xf32>, vector<8x16xf32>, vector<16x16xf32> -> vector<16x16xf32>
    %9 = vector.broadcast %6 : vector<16x1xf32> to vector<16x16xf32>
    %10 = arith.divf %8, %9 : vector<16x16xf32>
    %c8 = arith.constant 8 : index
    %c0_9 = arith.constant 0 : index
    %11 = vector.load %arg6[%c8, %c0_9] : memref<16x16xf32, #tpu.memory_space<vmem>>, vector<8x16xf32>
    %cst_10 = arith.constant dense<0.000000e+00> : vector<16x16xf32>
    %12 = tpu.matmul %1, %11, %cst_10 {dimension_numbers = #tpu.dot_dimension_numbers<[1], [0], [0], [1], [0, 0, 1, 1], [], []>} : vector<16x8xf32>, vector<8x16xf32>, vector<16x16xf32> -> vector<16x16xf32>
    %13 = arith.addf %10, %12 : vector<16x16xf32>
    %c0_11 = arith.constant 0 : index
    %c0_12 = arith.constant 0 : index
    %14 = vector.load %arg4[%c0_11, %c0_12] : memref<768x16xbf16, #tpu.memory_space<vmem>>, vector<768x16xbf16>
    %cst_13 = arith.constant dense<0.000000e+00> : vector<16x16xf32>
    %15 = tpu.matmul %0, %14, %cst_13 {dimension_numbers = #tpu.dot_dimension_numbers<[1], [0], [0], [1], [0, 0, 1, 1], [], []>} : vector<16x768xbf16>, vector<768x16xbf16>, vector<16x16xf32> -> vector<16x16xf32>
    %16 = arith.addf %15, %13 : vector<16x16xf32>
    %c0_14 = arith.constant 0 : index
    %c0_15 = arith.constant 0 : index
    %17 = vector.load %arg5[%c0_14, %c0_15] : memref<1x16xf32, #tpu.memory_space<vmem>>, vector<1x16xf32>
    %18 = vector.broadcast %17 : vector<1x16xf32> to vector<16x16xf32>
    %19 = arith.addf %16, %18 : vector<16x16xf32>
    %20 = tpu.iota {dimensions = array<i32: 1>} : vector<16x16xi32>
    %c8_i32 = arith.constant 8 : i32
    %21 = vector.broadcast %c8_i32 : i32 to vector<16x16xi32>
    %22 = arith.cmpi slt, %20, %21 : vector<16x16xi32>
    %cst_16 = arith.constant -1.000000e+30 : f32
    %23 = vector.broadcast %cst_16 : f32 to vector<16x16xf32>
    %24 = arith.select %22, %19, %23 : vector<16x16xi1>, vector<16x16xf32>
    %cst_17 = arith.constant dense<0xFF800000> : vector<16xf32>
    %25 = vector.multi_reduction <maximumf>, %24, %cst_17 [1] : vector<16x16xf32> to vector<16xf32>
    %26 = vector.shape_cast %25 : vector<16xf32> to vector<16x1xf32>
    %27 = vector.broadcast %26 : vector<16x1xf32> to vector<16x16xf32>
    %28 = arith.subf %24, %27 : vector<16x16xf32>
    %29 = math.exp %28 : vector<16x16xf32>
    %cst_18 = arith.constant dense<0.000000e+00> : vector<16xf32>
    %30 = vector.multi_reduction <add>, %29, %cst_18 [1] : vector<16x16xf32> to vector<16xf32>
    %31 = vector.shape_cast %30 : vector<16xf32> to vector<16x1xf32>
    %32 = math.log %31 : vector<16x1xf32>
    %33 = arith.addf %26, %32 : vector<16x1xf32>
    %34 = vector.broadcast %2 : vector<16x1xi32> to vector<16x16xi32>
    %35 = arith.cmpi eq, %20, %34 : vector<16x16xi32>
    %cst_19 = arith.constant 0.000000e+00 : f32
    %36 = vector.broadcast %cst_19 : f32 to vector<16x16xf32>
    %37 = arith.select %35, %24, %36 : vector<16x16xi1>, vector<16x16xf32>
    %cst_20 = arith.constant dense<0.000000e+00> : vector<16xf32>
    %38 = vector.multi_reduction <add>, %37, %cst_20 [1] : vector<16x16xf32> to vector<16xf32>
    %39 = vector.shape_cast %38 : vector<16xf32> to vector<16x1xf32>
    %40 = arith.subf %33, %39 : vector<16x1xf32>
    %41 = vector.broadcast %26 : vector<16x1xf32> to vector<16x16xf32>
    %42 = arith.cmpf oeq, %24, %41 : vector<16x16xf32>
    %c16_i32 = arith.constant 16 : i32
    %43 = vector.broadcast %c16_i32 : i32 to vector<16x16xi32>
    %44 = arith.select %42, %20, %43 : vector<16x16xi1>, vector<16x16xi32>
    %cst_21 = arith.constant dense<2147483647> : vector<16xi32>
    %45 = vector.multi_reduction <minsi>, %44, %cst_21 [1] : vector<16x16xi32> to vector<16xi32>
    %46 = vector.shape_cast %45 : vector<16xi32> to vector<16x1xi32>
    %47 = arith.sitofp %46 : vector<16x1xi32> to vector<16x1xf32>
    %c8_i32_22 = arith.constant 8 : i32
    %48 = vector.broadcast %c8_i32_22 : i32 to vector<16x16xi32>
    %49 = arith.cmpi eq, %20, %48 : vector<16x16xi32>
    %50 = vector.shape_cast %40 : vector<16x1xf32> to vector<16x1xf32>
    %51 = vector.broadcast %50 : vector<16x1xf32> to vector<16x16xf32>
    %52 = arith.select %49, %51, %19 : vector<16x16xi1>, vector<16x16xf32>
    %c9_i32 = arith.constant 9 : i32
    %53 = vector.broadcast %c9_i32 : i32 to vector<16x16xi32>
    %54 = arith.cmpi eq, %20, %53 : vector<16x16xi32>
    %55 = vector.shape_cast %47 : vector<16x1xf32> to vector<16x1xf32>
    %56 = vector.broadcast %55 : vector<16x1xf32> to vector<16x16xf32>
    %57 = arith.select %54, %56, %52 : vector<16x16xi1>, vector<16x16xf32>
    %c0_23 = arith.constant 0 : index
    %c0_24 = arith.constant 0 : index
    %58 = vector.load %arg7[%c0_23, %c0_24] : memref<16x16xf32, #tpu.memory_space<vmem>>, vector<16x16xf32>
    tpu.vector_store %arg7[%c0_23, %c0_24], %57 {strides = array<i32>} : memref<16x16xf32, #tpu.memory_space<vmem>>, vector<16x16xf32>,
    return
  }
  func.func @transform_0(%arg0: i32) -> (i32, i32) {
    %c0_i32 = arith.constant 0 : i32
    %c0_i32_0 = arith.constant 0 : i32
    return %arg0, %c0_i32 : i32, i32
  }
  func.func @transform_1(%arg0: i32) -> (i32, i32) {
    %c0_i32 = arith.constant 0 : i32
    %c0_i32_0 = arith.constant 0 : i32
    return %arg0, %c0_i32 : i32, i32
  }
  func.func @transform_2(%arg0: i32) -> (i32, i32) {
    %c0_i32 = arith.constant 0 : i32
    %c0_i32_0 = arith.constant 0 : i32
    return %arg0, %c0_i32 : i32, i32
  }
  func.func @transform_3(%arg0: i32) -> (i32, i32) {
    %c0_i32 = arith.constant 0 : i32
    %c0_i32_0 = arith.constant 0 : i32
    %c0_i32_1 = arith.constant 0 : i32
    return %c0_i32, %c0_i32_0 : i32, i32
  }
  func.func @transform_4(%arg0: i32) -> (i32, i32) {
    %c0_i32 = arith.constant 0 : i32
    %c0_i32_0 = arith.constant 0 : i32
    %c0_i32_1 = arith.constant 0 : i32
    return %c0_i32, %c0_i32_0 : i32, i32
  }
  func.func @transform_5(%arg0: i32) -> (i32, i32) {
    %c0_i32 = arith.constant 0 : i32
    %c0_i32_0 = arith.constant 0 : i32
    %c0_i32_1 = arith.constant 0 : i32
    return %c0_i32, %c0_i32_0 : i32, i32
  }
  func.func @transform_6(%arg0: i32) -> (i32, i32) {
    %c0_i32 = arith.constant 0 : i32
    %c0_i32_0 = arith.constant 0 : i32
    return %arg0, %c0_i32 : i32, i32
  }
}

</mosaic_0001>

<llo_original>
// kernel: tpu_custom_call.1
$region0: #{tpu_custom_call.1}
  #allocation0 [shape = 'u32[]', space=smem, size = 0x4, offset = 0x4, fixed_abs, tag = 'smem constant byte address 0x4 - core index']
  #allocation1 [shape = 'u32[144,128]{1,0:T(1,128)}', space=vmem, size = 0x12000, scoped, tag = 'internal scratch']
  %s0 = inlined_call_operand.vmem [shape: bf16[32,768], index: 0, kind: input, shape index: {}]
  %s1 = inlined_call_operand.vmem [shape: f32[32,8], index: 1, kind: input, shape index: {}]
  %s2 = inlined_call_operand.vmem [shape: s32[32,1], index: 2, kind: input, shape index: {}]
  %s3 = inlined_call_operand.vmem [shape: bf16[768,16], index: 3, kind: input, shape index: {}]
  %s4 = inlined_call_operand.vmem [shape: f32[1,16], index: 4, kind: input, shape index: {}]
  %s5 = inlined_call_operand.vmem [shape: f32[16,16], index: 5, kind: input, shape index: {}]
  %s6 = inlined_call_operand.vmem [shape: f32[32,16], index: 6, kind: output, shape index: {}]
  %s7 = sld [smem:[#allocation0]]
  $region57: #{tpu_custom_call.1} parent=0
    _
  %s9 = ssub.s32 1, %s7
  %s10 = scalar_select 0, %s9, %s7
  loop: start=0, step=1, limit=4
  $region2: #{tpu_custom_call.1} parent=0 // loop_pre_header
    _
  $region3: #{tpu_custom_call.1} parent=0 // loop_header
    %s12 = sphi 0, %s16
    %p13 = scmp.ge.s32.totalorder %s12, 4
    %s22 = sphi 0, %s24
    %s25 = sphi 0, %s22
    %s26 = sphi 0, %s25
    %s42 = sphi 0, %s26
    %s48 = sphi 0, %s50
    %s51 = sphi 0, %s48
    %s52 = sphi 0, %s51
    %s68 = sphi 0, %s52
    %s74 = sphi 0, %s76
    %s77 = sphi 0, %s74
    %s78 = sphi 0, %s77
    %s94 = sphi 0, %s78
    %s98 = sphi 0, %s98
    %s100 = sphi 0, %s98
    %s101 = sphi 0, %s100
    %s115 = sphi 0, %s101
    %s119 = sphi 0, %s119
    %s121 = sphi 0, %s119
    %s122 = sphi 0, %s121
    %s136 = sphi 0, %s122
    %s140 = sphi 0, %s140
    %s142 = sphi 0, %s140
    %s143 = sphi 0, %s142
    %s157 = sphi 0, %s143
    %s163 = sphi 0, %s165
    %s166 = sphi 0, %s163
    %s167 = sphi 0, %s166
    %s183 = sphi 0, %s167
  $region4: #{tpu_custom_call.1} parent=0 // loop_header_branch
    %15 = sbr.rel (%p13) target = $region8
  $region5: #{tpu_custom_call.1} parent=0 // loop_body
    %s17 = ssub.s32 %s12, 1
    %s18 = ssub.s32 %s12, 2
    %s19 = sadd.s32 %s12, 1
    %s20 = ssub.s32 %s12, %s19
    %p21 = scmp.eq.s32.totalorder %s20, 0
    %s23 = sadd.s32 %s22, 1
    %s24 = scalar_select %p21, %s22, %s23
    %p27 = pneg %p21
    %p28 = scmp.eq.s32.totalorder %s12, 1
    %p29 = por %p27, %p28
    %p30 = scmp.ne.s32.totalorder %s22, %s25
    %p31 = scmp.eq.s32.totalorder %s12, 0
    %p32 = por %p30, %p31
    %p33 = scmp.ne.s32.totalorder %s22, %s25
    %p34 = scmp.eq.s32.totalorder %s17, 1
    %p35 = por %p33, %p34
    %p36 = scmp.ne.s32.totalorder %s25, %s26
    %p37 = scmp.eq.s32.totalorder %s17, 0
    %p38 = por %p36, %p37
    %p39 = scmp.ne.s32.totalorder %s25, %s26
    %p40 = scmp.eq.s32.totalorder %s18, 1
    %p41 = por %p39, %p40
    %p43 = scmp.ne.s32.totalorder %s26, %s42
    %p44 = scmp.eq.s32.totalorder %s18, 0
    %p45 = por %p43, %p44
    %s46 = ssub.s32 %s12, %s19
    %p47 = scmp.eq.s32.totalorder %s46, 0
    %s49 = sadd.s32 %s48, 1
    %s50 = scalar_select %p47, %s48, %s49
    %p53 = pneg %p47
    %p54 = scmp.eq.s32.totalorder %s12, 1
    %p55 = por %p53, %p54
    %p56 = scmp.ne.s32.totalorder %s48, %s51
    %p57 = scmp.eq.s32.totalorder %s12, 0
    %p58 = por %p56, %p57
    %p59 = scmp.ne.s32.totalorder %s48, %s51
    %p60 = scmp.eq.s32.totalorder %s17, 1
    %p61 = por %p59, %p60
    %p62 = scmp.ne.s32.totalorder %s51, %s52
    %p63 = scmp.eq.s32.totalorder %s17, 0
    %p64 = por %p62, %p63
    %p65 = scmp.ne.s32.totalorder %s51, %s52
    %p66 = scmp.eq.s32.totalorder %s18, 1
    %p67 = por %p65, %p66
    %p69 = scmp.ne.s32.totalorder %s52, %s68
    %p70 = scmp.eq.s32.totalorder %s18, 0
    %p71 = por %p69, %p70
    %s72 = ssub.s32 %s12, %s19
    %p73 = scmp.eq.s32.totalorder %s72, 0
    %s75 = sadd.s32 %s74, 1
    %s76 = scalar_select %p73, %s74, %s75
    %p79 = pneg %p73
    %p80 = scmp.eq.s32.totalorder %s12, 1
    %p81 = por %p79, %p80
    %p82 = scmp.ne.s32.totalorder %s74, %s77
    %p83 = scmp.eq.s32.totalorder %s12, 0
    %p84 = por %p82, %p83
    %p85 = scmp.ne.s32.totalorder %s74, %s77
    %p86 = scmp.eq.s32.totalorder %s17, 1
    %p87 = por %p85, %p86
    %p88 = scmp.ne.s32.totalorder %s77, %s78
    %p89 = scmp.eq.s32.totalorder %s17, 0
    %p90 = por %p88, %p89
    %p91 = scmp.ne.s32.totalorder %s77, %s78
    %p92 = scmp.eq.s32.totalorder %s18, 1
    %p93 = por %p91, %p92
    %p95 = scmp.ne.s32.totalorder %s78, %s94
    %p96 = scmp.eq.s32.totalorder %s18, 0
    %p97 = por %p95, %p96
    %s99 = sadd.s32 %s98, 1
    %p102 = scmp.eq.s32.totalorder %s12, 1
    %p103 = scmp.ne.s32.totalorder %s98, %s100
    %p104 = scmp.eq.s32.totalorder %s12, 0
    %p105 = por %p103, %p104
    %p106 = scmp.ne.s32.totalorder %s98, %s100
    %p107 = scmp.eq.s32.totalorder %s17, 1
    %p108 = por %p106, %p107
    %p109 = scmp.ne.s32.totalorder %s100, %s101
    %p110 = scmp.eq.s32.totalorder %s17, 0
    %p111 = por %p109, %p110
    %p112 = scmp.ne.s32.totalorder %s100, %s101
    %p113 = scmp.eq.s32.totalorder %s18, 1
    %p114 = por %p112, %p113
    %p116 = scmp.ne.s32.totalorder %s101, %s115
    %p117 = scmp.eq.s32.totalorder %s18, 0
    %p118 = por %p116, %p117
    %s120 = sadd.s32 %s119, 1
    %p123 = scmp.eq.s32.totalorder %s12, 1
    %p124 = scmp.ne.s32.totalorder %s119, %s121
    %p125 = scmp.eq.s32.totalorder %s12, 0
    %p126 = por %p124, %p125
    %p127 = scmp.ne.s32.totalorder %s119, %s121
    %p128 = scmp.eq.s32.totalorder %s17, 1
    %p129 = por %p127, %p128
    %p130 = scmp.ne.s32.totalorder %s121, %s122
    %p131 = scmp.eq.s32.totalorder %s17, 0
    %p132 = por %p130, %p131
    %p133 = scmp.ne.s32.totalorder %s121, %s122
    %p134 = scmp.eq.s32.totalorder %s18, 1
    %p135 = por %p133, %p134
    %p137 = scmp.ne.s32.totalorder %s122, %s136
    %p138 = scmp.eq.s32.totalorder %s18, 0
    %p139 = por %p137, %p138
    %s141 = sadd.s32 %s140, 1
    %p144 = scmp.eq.s32.totalorder %s12, 1
    %p145 = scmp.ne.s32.totalorder %s140, %s142
    %p146 = scmp.eq.s32.totalorder %s12, 0
    %p147 = por %p145, %p146
    %p148 = scmp.ne.s32.totalorder %s140, %s142
    %p149 = scmp.eq.s32.totalorder %s17, 1
    %p150 = por %p148, %p149
    %p151 = scmp.ne.s32.totalorder %s142, %s143
    %p152 = scmp.eq.s32.totalorder %s17, 0
    %p153 = por %p151, %p152
    %p154 = scmp.ne.s32.totalorder %s142, %s143
    %p155 = scmp.eq.s32.totalorder %s18, 1
    %p156 = por %p154, %p155
    %p158 = scmp.ne.s32.totalorder %s143, %s157
    %p159 = scmp.eq.s32.totalorder %s18, 0
    %p160 = por %p158, %p159
    %s161 = ssub.s32 %s12, %s19
    %p162 = scmp.eq.s32.totalorder %s161, 0
    %s164 = sadd.s32 %s163, 1
    %s165 = scalar_select %p162, %s163, %s164
    %p168 = pneg %p162
    %p169 = scmp.eq.s32.totalorder %s12, 1
    %p170 = por %p168, %p169
    %p171 = scmp.ne.s32.totalorder %s163, %s166
    %p172 = scmp.eq.s32.totalorder %s12, 0
    %p173 = por %p171, %p172
    %p174 = scmp.ne.s32.totalorder %s163, %s166
    %p175 = scmp.eq.s32.totalorder %s17, 1
    %p176 = por %p174, %p175
    %p177 = scmp.ne.s32.totalorder %s166, %s167
    %p178 = scmp.eq.s32.totalorder %s17, 0
    %p179 = por %p177, %p178
    %p180 = scmp.ne.s32.totalorder %s166, %s167
    %p181 = scmp.eq.s32.totalorder %s18, 1
    %p182 = por %p180, %p181
    %p184 = scmp.ne.s32.totalorder %s167, %s183
    %p185 = scmp.eq.s32.totalorder %s18, 0
    %p186 = por %p184, %p185
    %p187 = scmp.le.s32.totalorder 1, %s12
    %p188 = scmp.lt.s32.totalorder %s12, 3
    %p189 = pnand %p187, %p188
    %p190 = pneg %p189
    // Predicated region
    $region9: #{tpu_custom_call.1} parent=5 // pred_check
      _
    $region10: #{tpu_custom_call.1} parent=5 // pred_check_branch
      %192 = sbr.rel (%p189) target = $region12
    $region11: #{tpu_custom_call.1} parent=5 // pred_region
      %s193 = ssub.s32 %s12, 1
      // Predicated region
      $region13: #{tpu_custom_call.1} parent=11 // pred_check
        %p194 = pneg %p111
      $region14: #{tpu_custom_call.1} parent=11 // pred_check_branch
        %196 = sbr.rel (%p194) target = $region16
      $region15: #{tpu_custom_call.1} parent=11 // pred_region
        _
      $region16: #{tpu_custom_call.1} parent=11 // pred_fallthru
        _
      // Predicated region
      $region17: #{tpu_custom_call.1} parent=11 // pred_check
        %p197 = pneg %p132
      $region18: #{tpu_custom_call.1} parent=11 // pred_check_branch
        %199 = sbr.rel (%p197) target = $region20
      $region19: #{tpu_custom_call.1} parent=11 // pred_region
        _
      $region20: #{tpu_custom_call.1} parent=11 // pred_fallthru
        _
      // Predicated region
      $region21: #{tpu_custom_call.1} parent=11 // pred_check
        %p200 = pneg %p153
      $region22: #{tpu_custom_call.1} parent=11 // pred_check_branch
        %202 = sbr.rel (%p200) target = $region24
      $region23: #{tpu_custom_call.1} parent=11 // pred_region
        _
      $region24: #{tpu_custom_call.1} parent=11 // pred_fallthru
        _
    $region12: #{tpu_custom_call.1} parent=5 // pred_fallthru
      _
    %p203 = scmp.lt.s32.totalorder %s12, 2
    // Predicated region
    $region25: #{tpu_custom_call.1} parent=5 // pred_check
      %p204 = pneg %p203
    $region26: #{tpu_custom_call.1} parent=5 // pred_check_branch
      %206 = sbr.rel (%p204) target = $region28
    $region27: #{tpu_custom_call.1} parent=5 // pred_region
      // Predicated region
      $region29: #{tpu_custom_call.1} parent=27 // pred_check
        %p207 = pneg %p32
      $region30: #{tpu_custom_call.1} parent=27 // pred_check_branch
        %209 = sbr.rel (%p207) target = $region32
      $region31: #{tpu_custom_call.1} parent=27 // pred_region
        %s210 = smul.u32 2, %s12
        %p211 = scmp.lt.s32.totalorder %s210, 3
        %s212 = scalar_select %p211, %s210, 3
        %s213 = smul.addr %s212, 6
        %s214 = smul.addr %s213, 4
        %s215 = scalar_lea.vmem %s0, %s214
        %s216 = smul.u32 2, %s12
      $region32: #{tpu_custom_call.1} parent=27 // pred_fallthru
        _
      // Predicated region
      $region33: #{tpu_custom_call.1} parent=27 // pred_check
        %p217 = pneg %p58
      $region34: #{tpu_custom_call.1} parent=27 // pred_check_branch
        %219 = sbr.rel (%p217) target = $region36
      $region35: #{tpu_custom_call.1} parent=27 // pred_region
        %s220 = smul.u32 2, %s12
        %p221 = scmp.lt.s32.totalorder %s220, 3
        %s222 = scalar_select %p221, %s220, 3
        %s223 = smul.addr %s222, 8
        %s224 = scalar_lea.vmem %s1, %s223
        %s225 = smul.u32 2, %s12
      $region36: #{tpu_custom_call.1} parent=27 // pred_fallthru
        _
      // Predicated region
      $region37: #{tpu_custom_call.1} parent=27 // pred_check
        %p226 = pneg %p84
      $region38: #{tpu_custom_call.1} parent=27 // pred_check_branch
        %228 = sbr.rel (%p226) target = $region40
      $region39: #{tpu_custom_call.1} parent=27 // pred_region
        %s229 = smul.u32 2, %s12
        %p230 = scmp.lt.s32.totalorder %s229, 3
        %s231 = scalar_select %p230, %s229, 3
        %s232 = smul.addr %s231, 8
        %s233 = scalar_lea.vmem %s2, %s232
        %s234 = smul.u32 2, %s12
      $region40: #{tpu_custom_call.1} parent=27 // pred_fallthru
        _
    $region28: #{tpu_custom_call.1} parent=5 // pred_fallthru
      _
    %p235 = scmp.le.s32.totalorder 1, %s12
    %p236 = scmp.lt.s32.totalorder %s12, 3
    %p237 = pnand %p235, %p236
    %p238 = pneg %p237
    // Predicated region
    $region41: #{tpu_custom_call.1} parent=5 // pred_check
      _
    $region42: #{tpu_custom_call.1} parent=5 // pred_check_branch
      %240 = sbr.rel (%p237) target = $region44
    $region43: #{tpu_custom_call.1} parent=5 // pred_region
      %s241 = ssub.s32 %s12, 1
      %s242 = smul.u32 2, %s17
      %p243 = scmp.lt.s32.totalorder %s242, 3
      %s244 = scalar_select %p243, %s242, 3
      %s245 = smul.addr %s244, 6
      %s246 = smul.addr %s245, 4
      %s247 = scalar_lea.vmem %s0, %s246
      %p248 = pneg %p38
      %p249 = pneg %p35
      %s250 = smul.u32 2, %s17
      %p251 = scmp.lt.s32.totalorder %s250, 3
      %s252 = scalar_select %p251, %s250, 3
      %s253 = smul.addr %s252, 8
      %s254 = scalar_lea.vmem %s1, %s253
      %p255 = pneg %p64
      %p256 = pneg %p61
      %s257 = smul.u32 2, %s17
      %p258 = scmp.lt.s32.totalorder %s257, 3
      %s259 = scalar_select %p258, %s257, 3
      %s260 = smul.addr %s259, 8
      %s261 = scalar_lea.vmem %s2, %s260
      %p262 = pneg %p90
      %p263 = pneg %p87
      %p264 = pneg %p111
      %p265 = pneg %p108
      %p266 = pneg %p132
      %p267 = pneg %p129
      %p268 = pneg %p153
      %p269 = pneg %p150
      %p270 = pneg %p179
      %p271 = pneg %p176
      %s272 = smul.u32 2, %s17
      %p273 = scmp.lt.s32.totalorder %s272, 3
      %s274 = scalar_select %p273, %s272, 3
      %s275 = smul.addr %s274, 8
      %s276 = scalar_lea.vmem %s6, %s275
      %s277 = smul.u32 2, %s17
      %p278 = scmp.lt.s32.totalorder %s277, 3
      %s279 = scalar_select %p278, %s277, 3
      %s280 = smul.addr %s279, 6
      %s281 = smul.addr %s280, 4
      %s282 = scalar_lea.vmem %s0, %s281
      %s283 = smul.u32 2, %s17
      %s284 = smul.u32 2, %s17
      %p285 = scmp.lt.s32.totalorder %s284, 3
      %s286 = scalar_select %p285, %s284, 3
      %s287 = smul.addr %s286, 8
      %s288 = scalar_lea.vmem %s1, %s287
      %s289 = smul.u32 2, %s17
      %s290 = smul.u32 2, %s17
      %p291 = scmp.lt.s32.totalorder %s290, 3
      %s292 = scalar_select %p291, %s290, 3
      %s293 = smul.addr %s292, 8
      %s294 = scalar_lea.vmem %s2, %s293
      %s295 = smul.u32 2, %s17
      %s296 = smul.u32 2, %s17
      %p297 = scmp.lt.s32.totalorder %s296, 3
      %s298 = scalar_select %p297, %s296, 3
      %s299 = smul.addr %s298, 8
      %s300 = scalar_lea.vmem %s6, %s299
      %s301 = smul.u32 2, %s17
      %v303 = vld [vmem:[%s282] sm:$0xff]
      %v304 = vld [vmem:[%s282 + $0x8] sm:$0xff]
      %v305 = vld [vmem:[%s282 + $0x10] sm:$0xff]
      %v306 = vld [vmem:[%s282 + $0x18] sm:$0xff]
      %v307 = vld [vmem:[%s282 + $0x20] sm:$0xff]
      %v308 = vld [vmem:[%s282 + $0x28] sm:$0xff]
      %v309 = vld [vmem:[%s288] sm:$0xff]
      %v310 = vld [vmem:[%s288 + $0x8] sm:$0xff]
      %v311 = vld [vmem:[%s294] sm:$0xff]
      %v312 = vld [vmem:[%s294 + $0x8] sm:$0xff]
      %vm313 = vcmask 64512
      %v314 = vsel %vm313, %v309, 0.0
      %315 = vadd.xlane.f32.xlu0 %v314
      %v316 = vpop.xlane.xlu0 %315
      %v317 = vsel %vm313, %v310, 0.0
      %318 = vadd.xlane.f32.xlu0 %v317
      %v319 = vpop.xlane.xlu0 %318
      %v320 = vmax.f32 %v316, 1e-05
      %v321 = vmax.f32 %v319, 1e-05
      %v322 = vld [vmem:[%s5] sm:$0xff]
      %v324 = vsel %vm313, %v309, 0
      %v327 = vsel %vm313, %v310, 0
      %329 = vmatprep.subr.mxu0 0.0
      %330 = vmatpush1.msra.mxu0 %v322
      %331 = vmatprep.subr.mxu0 0.0
      %332 = vmatpush1.msra.mxu0 0.0
      %333 = vmatprep.subr.mxu0 0.0
      %334 = vmatpush1.msra.mxu0 0.0
      %335 = vmatprep.subr.mxu0 0.0
      %336 = vmatpush1.msra.mxu0 0.0
      %337 = vmatprep.subr.mxu0 0.0
      %338 = vmatpush1.msra.mxu0 0.0
      %339 = vmatprep.subr.mxu0 0.0
      %340 = vmatpush1.msra.mxu0 0.0
      %341 = vmatprep.subr.mxu0 0.0
      %342 = vmatpush1.msra.mxu0 0.0
      %343 = vmatprep.subr.mxu0 0.0
      %344 = vmatpush1.msra.mxu0 0.0
      %345 = vmatprep.subr.mxu0 0.0
      %346 = vmatpush1.msra.mxu0 0.0
      %347 = vmatprep.subr.mxu0 0.0
      %348 = vmatpush1.msra.mxu0 0.0
      %349 = vmatprep.subr.mxu0 0.0
      %350 = vmatpush1.msra.mxu0 0.0
      %351 = vmatprep.subr.mxu0 0.0
      %352 = vmatpush1.msra.mxu0 0.0
      %353 = vmatprep.subr.mxu0 0.0
      %354 = vmatpush1.msra.mxu0 0.0
      %355 = vmatprep.subr.mxu0 0.0
      %356 = vmatpush1.msra.mxu0 0.0
      %357 = vmatprep.subr.mxu0 0.0
      %358 = vmatpush1.msra.mxu0 0.0
      %359 = vmatprep.subr.mxu0 0.0
      %360 = vmatpush1.msra.mxu0 0.0
      %361 = vmatprep.subr.mxu0 0.0
      %362 = vmatpush1.msra.mxu0 0.0
      %363 = vmatprep.subr.mxu0 0.0
      %364 = vmatpush1.msra.mxu0 0.0
      %365 = vmatprep.subr.mxu0 0.0
      %366 = vmatpush1.msra.mxu0 0.0
      %367 = vmatprep.subr.mxu0 0.0
      %368 = vmatpush1.msra.mxu0 0.0
      %369 = vmatprep.subr.mxu0 0.0
      %370 = vmatpush1.msra.mxu0 0.0
      %371 = vmatprep.subr.mxu0 0.0
      %372 = vmatpush1.msra.mxu0 0.0
      %373 = vmatprep.subr.mxu0 0.0
      %374 = vmatpush1.msra.mxu0 0.0
      %375 = vmatprep.subr.mxu0 0.0
      %376 = vmatpush1.msra.mxu0 0.0
      %377 = vmatprep.subr.mxu0 0.0
      %378 = vmatpush1.msra.mxu0 0.0
      %379 = vmatprep.subr.mxu0 0.0
      %380 = vmatpush1.msra.mxu0 0.0
      %381 = vmatprep.subr.mxu0 0.0
      %382 = vmatpush1.msra.mxu0 0.0
      %383 = vmatprep.subr.mxu0 0.0
      %384 = vmatpush1.msra.mxu0 0.0
      %385 = vmatprep.subr.mxu0 0.0
      %386 = vmatpush1.msra.mxu0 0.0
      %387 = vmatprep.subr.mxu0 0.0
      %388 = vmatpush1.msra.mxu0 0.0
      %389 = vmatprep.subr.mxu0 0.0
      %390 = vmatpush1.msra.mxu0 0.0
      %391 = vmatprep.subr.mxu0 0.0
      %392 = vmatpush1.msra.mxu0 0.0
      %393 = vmatprep.mubr.f32.mxu0 0.0
      %394 = vmatmul.mubr.f32.gmra.mrb[0].mxu0 %v324
      %v395 = vpop.f32.mrb[0].mxu0
      %v396 = vadd.f32 0.0, %v395
      %v397 = vpop.f32.mrb[0].mxu0
      %398 = vmatprep.mubr.f32.mxu0 0.0
      %399 = vmatmul.mubr.f32.gmra.mrb[0].mxu0 %v327
      %v400 = vpop.f32.mrb[0].mxu0
      %v401 = vadd.f32 0.0, %v400
      %v402 = vpop.f32.mrb[0].mxu0
      %403 = vdwg.mxu0
      %v404 = vrcp.pop %v320
      %v405 = vmul.f32 %v396, %v404
      %v406 = vrcp.pop %v321
      %v407 = vmul.f32 %v401, %v406
      %v408 = vld [vmem:[%s5 + $0x8] sm:$0xff]
      %409 = vmatprep.subr.mxu0 0.0
      %410 = vmatpush1.msra.mxu0 %v408
      %411 = vmatprep.subr.mxu0 0.0
      %412 = vmatpush1.msra.mxu0 0.0
      %413 = vmatprep.subr.mxu0 0.0
      %414 = vmatpush1.msra.mxu0 0.0
      %415 = vmatprep.subr.mxu0 0.0
      %416 = vmatpush1.msra.mxu0 0.0
      %417 = vmatprep.subr.mxu0 0.0
      %418 = vmatpush1.msra.mxu0 0.0
      %419 = vmatprep.subr.mxu0 0.0
      %420 = vmatpush1.msra.mxu0 0.0
      %421 = vmatprep.subr.mxu0 0.0
      %422 = vmatpush1.msra.mxu0 0.0
      %423 = vmatprep.subr.mxu0 0.0
      %424 = vmatpush1.msra.mxu0 0.0
      %425 = vmatprep.subr.mxu0 0.0
      %426 = vmatpush1.msra.mxu0 0.0
      %427 = vmatprep.subr.mxu0 0.0
      %428 = vmatpush1.msra.mxu0 0.0
      %429 = vmatprep.subr.mxu0 0.0
      %430 = vmatpush1.msra.mxu0 0.0
      %431 = vmatprep.subr.mxu0 0.0
      %432 = vmatpush1.msra.mxu0 0.0
      %433 = vmatprep.subr.mxu0 0.0
      %434 = vmatpush1.msra.mxu0 0.0
      %435 = vmatprep.subr.mxu0 0.0
      %436 = vmatpush1.msra.mxu0 0.0
      %437 = vmatprep.subr.mxu0 0.0
      %438 = vmatpush1.msra.mxu0 0.0
      %439 = vmatprep.subr.mxu0 0.0
      %440 = vmatpush1.msra.mxu0 0.0
      %441 = vmatprep.subr.mxu0 0.0
      %442 = vmatpush1.msra.mxu0 0.0
      %443 = vmatprep.subr.mxu0 0.0
      %444 = vmatpush1.msra.mxu0 0.0
      %445 = vmatprep.subr.mxu0 0.0
      %446 = vmatpush1.msra.mxu0 0.0
      %447 = vmatprep.subr.mxu0 0.0
      %448 = vmatpush1.msra.mxu0 0.0
      %449 = vmatprep.subr.mxu0 0.0
      %450 = vmatpush1.msra.mxu0 0.0
      %451 = vmatprep.subr.mxu0 0.0
      %452 = vmatpush1.msra.mxu0 0.0
      %453 = vmatprep.subr.mxu0 0.0
      %454 = vmatpush1.msra.mxu0 0.0
      %455 = vmatprep.subr.mxu0 0.0
      %456 = vmatpush1.msra.mxu0 0.0
      %457 = vmatprep.subr.mxu0 0.0
      %458 = vmatpush1.msra.mxu0 0.0
      %459 = vmatprep.subr.mxu0 0.0
      %460 = vmatpush1.msra.mxu0 0.0
      %461 = vmatprep.subr.mxu0 0.0
      %462 = vmatpush1.msra.mxu0 0.0
      %463 = vmatprep.subr.mxu0 0.0
      %464 = vmatpush1.msra.mxu0 0.0
      %465 = vmatprep.subr.mxu0 0.0
      %466 = vmatpush1.msra.mxu0 0.0
      %467 = vmatprep.subr.mxu0 0.0
      %468 = vmatpush1.msra.mxu0 0.0
      %469 = vmatprep.subr.mxu0 0.0
      %470 = vmatpush1.msra.mxu0 0.0
      %471 = vmatprep.subr.mxu0 0.0
      %472 = vmatpush1.msra.mxu0 0.0
      %473 = vmatprep.mubr.f32.mxu0 0.0
      %474 = vmatmul.mubr.f32.gmra.mrb[0].mxu0 %v324
      %v475 = vpop.f32.mrb[0].mxu0
      %v476 = vadd.f32 0.0, %v475
      %v477 = vpop.f32.mrb[0].mxu0
      %478 = vmatprep.mubr.f32.mxu0 0.0
      %479 = vmatmul.mubr.f32.gmra.mrb[0].mxu0 %v327
      %v480 = vpop.f32.mrb[0].mxu0
      %v481 = vadd.f32 0.0, %v480
      %v482 = vpop.f32.mrb[0].mxu0
      %483 = vdwg.mxu0
      %v484 = vadd.f32 %v405, %v476
      %v485 = vadd.f32 %v407, %v481
      %v486 = vld [vmem:[%s3] sm:$0xf]
      %v487 = vld [vmem:[%s3 + $0x4] sm:$0xf]
      %v488 = vld [vmem:[%s3 + $0x8] sm:$0xf]
      %v489 = vld [vmem:[%s3 + $0xc] sm:$0xf]
      %v490 = vld [vmem:[%s3 + $0x10] sm:$0xf]
      %v491 = vld [vmem:[%s3 + $0x14] sm:$0xf]
      %v492 = vld [vmem:[%s3 + $0x18] sm:$0xf]
      %v493 = vld [vmem:[%s3 + $0x1c] sm:$0xf]
      %v494 = vld [vmem:[%s3 + $0x20] sm:$0xf]
      %v495 = vld [vmem:[%s3 + $0x24] sm:$0xf]
      %v496 = vld [vmem:[%s3 + $0x28] sm:$0xf]
      %v497 = vld [vmem:[%s3 + $0x2c] sm:$0xf]
      %v498 = vld [vmem:[%s3 + $0x30] sm:$0xf]
      %v499 = vld [vmem:[%s3 + $0x34] sm:$0xf]
      %v500 = vld [vmem:[%s3 + $0x38] sm:$0xf]
      %v501 = vld [vmem:[%s3 + $0x3c] sm:$0xf]
      %v502 = vld [vmem:[%s3 + $0x40] sm:$0xf]
      %v503 = vld [vmem:[%s3 + $0x44] sm:$0xf]
      %v504 = vld [vmem:[%s3 + $0x48] sm:$0xf]
      %v505 = vld [vmem:[%s3 + $0x4c] sm:$0xf]
      %v506 = vld [vmem:[%s3 + $0x50] sm:$0xf]
      %v507 = vld [vmem:[%s3 + $0x54] sm:$0xf]
      %v508 = vld [vmem:[%s3 + $0x58] sm:$0xf]
      %v509 = vld [vmem:[%s3 + $0x5c] sm:$0xf]
      %v510 = vld [vmem:[%s3 + $0x60] sm:$0xf]
      %v511 = vld [vmem:[%s3 + $0x64] sm:$0xf]
      %v512 = vld [vmem:[%s3 + $0x68] sm:$0xf]
      %v513 = vld [vmem:[%s3 + $0x6c] sm:$0xf]
      %v514 = vld [vmem:[%s3 + $0x70] sm:$0xf]
      %v515 = vld [vmem:[%s3 + $0x74] sm:$0xf]
      %v516 = vld [vmem:[%s3 + $0x78] sm:$0xf]
      %v517 = vld [vmem:[%s3 + $0x7c] sm:$0xf]
      %v518 = vld [vmem:[%s3 + $0x80] sm:$0xf]
      %v519 = vld [vmem:[%s3 + $0x84] sm:$0xf]
      %v520 = vld [vmem:[%s3 + $0x88] sm:$0xf]
      %v521 = vld [vmem:[%s3 + $0x8c] sm:$0xf]
      %v522 = vld [vmem:[%s3 + $0x90] sm:$0xf]
      %v523 = vld [vmem:[%s3 + $0x94] sm:$0xf]
      %v524 = vld [vmem:[%s3 + $0x98] sm:$0xf]
      %v525 = vld [vmem:[%s3 + $0x9c] sm:$0xf]
      %v526 = vld [vmem:[%s3 + $0xa0] sm:$0xf]
      %v527 = vld [vmem:[%s3 + $0xa4] sm:$0xf]
      %v528 = vld [vmem:[%s3 + $0xa8] sm:$0xf]
      %v529 = vld [vmem:[%s3 + $0xac] sm:$0xf]
      %v530 = vld [vmem:[%s3 + $0xb0] sm:$0xf]
      %v531 = vld [vmem:[%s3 + $0xb4] sm:$0xf]
      %v532 = vld [vmem:[%s3 + $0xb8] sm:$0xf]
      %v533 = vld [vmem:[%s3 + $0xbc] sm:$0xf]
      %v534 = vld [vmem:[%s3 + $0xc0] sm:$0xf]
      %v535 = vld [vmem:[%s3 + $0xc4] sm:$0xf]
      %v536 = vld [vmem:[%s3 + $0xc8] sm:$0xf]
      %v537 = vld [vmem:[%s3 + $0xcc] sm:$0xf]
      %v538 = vld [vmem:[%s3 + $0xd0] sm:$0xf]
      %v539 = vld [vmem:[%s3 + $0xd4] sm:$0xf]
      %v540 = vld [vmem:[%s3 + $0xd8] sm:$0xf]
      %v541 = vld [vmem:[%s3 + $0xdc] sm:$0xf]
      %v542 = vld [vmem:[%s3 + $0xe0] sm:$0xf]
      %v543 = vld [vmem:[%s3 + $0xe4] sm:$0xf]
      %v544 = vld [vmem:[%s3 + $0xe8] sm:$0xf]
      %v545 = vld [vmem:[%s3 + $0xec] sm:$0xf]
      %v546 = vld [vmem:[%s3 + $0xf0] sm:$0xf]
      %v547 = vld [vmem:[%s3 + $0xf4] sm:$0xf]
      %v548 = vld [vmem:[%s3 + $0xf8] sm:$0xf]
      %v549 = vld [vmem:[%s3 + $0xfc] sm:$0xf]
      %v550 = vld [vmem:[%s3 + $0x100] sm:$0xf]
      %v551 = vld [vmem:[%s3 + $0x104] sm:$0xf]
      %v552 = vld [vmem:[%s3 + $0x108] sm:$0xf]
      %v553 = vld [vmem:[%s3 + $0x10c] sm:$0xf]
      %v554 = vld [vmem:[%s3 + $0x110] sm:$0xf]
      %v555 = vld [vmem:[%s3 + $0x114] sm:$0xf]
      %v556 = vld [vmem:[%s3 + $0x118] sm:$0xf]
      %v557 = vld [vmem:[%s3 + $0x11c] sm:$0xf]
      %v558 = vld [vmem:[%s3 + $0x120] sm:$0xf]
      %v559 = vld [vmem:[%s3 + $0x124] sm:$0xf]
      %v560 = vld [vmem:[%s3 + $0x128] sm:$0xf]
      %v561 = vld [vmem:[%s3 + $0x12c] sm:$0xf]
      %v562 = vld [vmem:[%s3 + $0x130] sm:$0xf]
      %v563 = vld [vmem:[%s3 + $0x134] sm:$0xf]
      %v564 = vld [vmem:[%s3 + $0x138] sm:$0xf]
      %v565 = vld [vmem:[%s3 + $0x13c] sm:$0xf]
      %v566 = vld [vmem:[%s3 + $0x140] sm:$0xf]
      %v567 = vld [vmem:[%s3 + $0x144] sm:$0xf]
      %v568 = vld [vmem:[%s3 + $0x148] sm:$0xf]
      %v569 = vld [vmem:[%s3 + $0x14c] sm:$0xf]
      %v570 = vld [vmem:[%s3 + $0x150] sm:$0xf]
      %v571 = vld [vmem:[%s3 + $0x154] sm:$0xf]
      %v572 = vld [vmem:[%s3 + $0x158] sm:$0xf]
      %v573 = vld [vmem:[%s3 + $0x15c] sm:$0xf]
      %v574 = vld [vmem:[%s3 + $0x160] sm:$0xf]
      %v575 = vld [vmem:[%s3 + $0x164] sm:$0xf]
      %v576 = vld [vmem:[%s3 + $0x168] sm:$0xf]
      %v577 = vld [vmem:[%s3 + $0x16c] sm:$0xf]
      %v578 = vld [vmem:[%s3 + $0x170] sm:$0xf]
      %v579 = vld [vmem:[%s3 + $0x174] sm:$0xf]
      %v580 = vld [vmem:[%s3 + $0x178] sm:$0xf]
      %v581 = vld [vmem:[%s3 + $0x17c] sm:$0xf]
      %v588 = vunpack.c.l.b16 %v303
      %v589 = vunpack.c.h.b16 %v303
      %v590 = vunpack.c.l.b16 %v304
      %v591 = vunpack.c.h.b16 %v304
      %v592 = vunpack.c.l.b16 %v305
      %v593 = vunpack.c.h.b16 %v305
      %v594 = vunpack.c.l.b16 %v306
      %v595 = vunpack.c.h.b16 %v306
      %v596 = vunpack.c.l.b16 %v307
      %v597 = vunpack.c.h.b16 %v307
      %v598 = vunpack.c.l.b16 %v308
      %v599 = vunpack.c.h.b16 %v308
      %v600 = vpack.c.b16 %v594, %v588
      %v601 = vpack.c.b16 %v595, %v589
      %v602 = vpack.c.b16 %v596, %v590
      %v603 = vpack.c.b16 %v597, %v591
      %v604 = vpack.c.b16 %v598, %v592
      %v605 = vpack.c.b16 %v599, %v593
      %v708 = vunpack.c.l.b16 %v486
      %v709 = vunpack.c.l.b16 %v487
      %v710 = vunpack.c.l.b16 %v488
      %v711 = vunpack.c.l.b16 %v489
      %v712 = vunpack.c.l.b16 %v490
      %v713 = vunpack.c.l.b16 %v491
      %v714 = vunpack.c.l.b16 %v492
      %v715 = vunpack.c.l.b16 %v493
      %v716 = vunpack.c.l.b16 %v494
      %v717 = vunpack.c.l.b16 %v495
      %v718 = vunpack.c.l.b16 %v496
      %v719 = vunpack.c.l.b16 %v497
      %v720 = vunpack.c.l.b16 %v498
      %v721 = vunpack.c.l.b16 %v499
      %v722 = vunpack.c.l.b16 %v500
      %v723 = vunpack.c.l.b16 %v501
      %v724 = vunpack.c.l.b16 %v502
      %v725 = vunpack.c.l.b16 %v503
      %v726 = vunpack.c.l.b16 %v504
      %v727 = vunpack.c.l.b16 %v505
      %v728 = vunpack.c.l.b16 %v506
      %v729 = vunpack.c.l.b16 %v507
      %v730 = vunpack.c.l.b16 %v508
      %v731 = vunpack.c.l.b16 %v509
      %v732 = vunpack.c.l.b16 %v510
      %v733 = vunpack.c.l.b16 %v511
      %v734 = vunpack.c.l.b16 %v512
      %v735 = vunpack.c.l.b16 %v513
      %v736 = vunpack.c.l.b16 %v514
      %v737 = vunpack.c.l.b16 %v515
      %v738 = vunpack.c.l.b16 %v516
      %v739 = vunpack.c.l.b16 %v517
      %v740 = vunpack.c.l.b16 %v518
      %v741 = vunpack.c.l.b16 %v519
      %v742 = vunpack.c.l.b16 %v520
      %v743 = vunpack.c.l.b16 %v521
      %v744 = vunpack.c.l.b16 %v522
      %v745 = vunpack.c.l.b16 %v523
      %v746 = vunpack.c.l.b16 %v524
      %v747 = vunpack.c.l.b16 %v525
      %v748 = vunpack.c.l.b16 %v526
      %v749 = vunpack.c.l.b16 %v527
      %v750 = vunpack.c.l.b16 %v528
      %v751 = vunpack.c.l.b16 %v529
      %v752 = vunpack.c.l.b16 %v530
      %v753 = vunpack.c.l.b16 %v531
      %v754 = vunpack.c.l.b16 %v532
      %v755 = vunpack.c.l.b16 %v533
      %v756 = vunpack.c.l.b16 %v534
      %v757 = vunpack.c.l.b16 %v535
      %v758 = vunpack.c.l.b16 %v536
      %v759 = vunpack.c.l.b16 %v537
      %v760 = vunpack.c.l.b16 %v538
      %v761 = vunpack.c.l.b16 %v539
      %v762 = vunpack.c.l.b16 %v540
      %v763 = vunpack.c.l.b16 %v541
      %v764 = vunpack.c.l.b16 %v542
      %v765 = vunpack.c.l.b16 %v543
      %v766 = vunpack.c.l.b16 %v544
      %v767 = vunpack.c.l.b16 %v545
      %v768 = vunpack.c.l.b16 %v546
      %v769 = vunpack.c.l.b16 %v547
      %v770 = vunpack.c.l.b16 %v548
      %v771 = vunpack.c.l.b16 %v549
      %v772 = vunpack.c.l.b16 %v550
      %v773 = vunpack.c.l.b16 %v551
      %v774 = vunpack.c.l.b16 %v552
      %v775 = vunpack.c.l.b16 %v553
      %v776 = vunpack.c.l.b16 %v554
      %v777 = vunpack.c.l.b16 %v555
      %v778 = vunpack.c.l.b16 %v556
      %v779 = vunpack.c.l.b16 %v557
      %v780 = vunpack.c.l.b16 %v558
      %v781 = vunpack.c.l.b16 %v559
      %v782 = vunpack.c.l.b16 %v560
      %v783 = vunpack.c.l.b16 %v561
      %v784 = vunpack.c.l.b16 %v562
      %v785 = vunpack.c.l.b16 %v563
      %v786 = vunpack.c.l.b16 %v564
      %v787 = vunpack.c.l.b16 %v565
      %v788 = vunpack.c.l.b16 %v566
      %v789 = vunpack.c.l.b16 %v567
      %v790 = vunpack.c.l.b16 %v568
      %v791 = vunpack.c.l.b16 %v569
      %v792 = vunpack.c.l.b16 %v570
      %v793 = vunpack.c.l.b16 %v571
      %v794 = vunpack.c.l.b16 %v572
      %v795 = vunpack.c.l.b16 %v573
      %v796 = vunpack.c.l.b16 %v574
      %v797 = vunpack.c.l.b16 %v575
      %v798 = vunpack.c.l.b16 %v576
      %v799 = vunpack.c.l.b16 %v577
      %v800 = vunpack.c.l.b16 %v578
      %v801 = vunpack.c.l.b16 %v579
      %v802 = vunpack.c.l.b16 %v580
      %v803 = vunpack.c.l.b16 %v581
      %v804 = vpack.c.b16 %v709, %v708
      %v805 = vpack.c.b16 %v711, %v710
      %v806 = vpack.c.b16 %v713, %v712
      %v807 = vpack.c.b16 %v715, %v714
      %v808 = vpack.c.b16 %v717, %v716
      %v809 = vpack.c.b16 %v719, %v718
      %v810 = vpack.c.b16 %v721, %v720
      %v811 = vpack.c.b16 %v723, %v722
      %v812 = vpack.c.b16 %v725, %v724
      %v813 = vpack.c.b16 %v727, %v726
      %v814 = vpack.c.b16 %v729, %v728
      %v815 = vpack.c.b16 %v731, %v730
      %v816 = vpack.c.b16 %v733, %v732
      %v817 = vpack.c.b16 %v735, %v734
      %v818 = vpack.c.b16 %v737, %v736
      %v819 = vpack.c.b16 %v739, %v738
      %v820 = vpack.c.b16 %v741, %v740
      %v821 = vpack.c.b16 %v743, %v742
      %v822 = vpack.c.b16 %v745, %v744
      %v823 = vpack.c.b16 %v747, %v746
      %v824 = vpack.c.b16 %v749, %v748
      %v825 = vpack.c.b16 %v751, %v750
      %v826 = vpack.c.b16 %v753, %v752
      %v827 = vpack.c.b16 %v755, %v754
      %v828 = vpack.c.b16 %v757, %v756
      %v829 = vpack.c.b16 %v759, %v758
      %v830 = vpack.c.b16 %v761, %v760
      %v831 = vpack.c.b16 %v763, %v762
      %v832 = vpack.c.b16 %v765, %v764
      %v833 = vpack.c.b16 %v767, %v766
      %v834 = vpack.c.b16 %v769, %v768
      %v835 = vpack.c.b16 %v771, %v770
      %v836 = vpack.c.b16 %v773, %v772
      %v837 = vpack.c.b16 %v775, %v774
      %v838 = vpack.c.b16 %v777, %v776
      %v839 = vpack.c.b16 %v779, %v778
      %v840 = vpack.c.b16 %v781, %v780
      %v841 = vpack.c.b16 %v783, %v782
      %v842 = vpack.c.b16 %v785, %v784
      %v843 = vpack.c.b16 %v787, %v786
      %v844 = vpack.c.b16 %v789, %v788
      %v845 = vpack.c.b16 %v791, %v790
      %v846 = vpack.c.b16 %v793, %v792
      %v847 = vpack.c.b16 %v795, %v794
      %v848 = vpack.c.b16 %v797, %v796
      %v849 = vpack.c.b16 %v799, %v798
      %v850 = vpack.c.b16 %v801, %v800
      %v851 = vpack.c.b16 %v803, %v802
      %900 = vmatprep.subr.bf16.mxu0 0
      %901 = vmatpush1.bf16.msra.mxu0 %v804
      %902 = vmatprep.subr.bf16.mxu0 0
      %903 = vmatpush1.bf16.msra.mxu0 %v805
      %904 = vmatprep.subr.bf16.mxu0 0
      %905 = vmatpush1.bf16.msra.mxu0 %v806
      %906 = vmatprep.subr.bf16.mxu0 0
      %907 = vmatpush1.bf16.msra.mxu0 %v807
      %908 = vmatprep.subr.bf16.mxu0 0
      %909 = vmatpush1.bf16.msra.mxu0 %v808
      %910 = vmatprep.subr.bf16.mxu0 0
      %911 = vmatpush1.bf16.msra.mxu0 %v809
      %912 = vmatprep.subr.bf16.mxu0 0
      %913 = vmatpush1.bf16.msra.mxu0 %v810
      %914 = vmatprep.subr.bf16.mxu0 0
      %915 = vmatpush1.bf16.msra.mxu0 %v811
      %916 = vmatprep.subr.bf16.mxu0 0
      %917 = vmatpush1.bf16.msra.mxu0 %v812
      %918 = vmatprep.subr.bf16.mxu0 0
      %919 = vmatpush1.bf16.msra.mxu0 %v813
      %920 = vmatprep.subr.bf16.mxu0 0
      %921 = vmatpush1.bf16.msra.mxu0 %v814
      %922 = vmatprep.subr.bf16.mxu0 0
      %923 = vmatpush1.bf16.msra.mxu0 %v815
      %924 = vmatprep.subr.bf16.mxu0 0
      %925 = vmatpush1.bf16.msra.mxu0 %v816
      %926 = vmatprep.subr.bf16.mxu0 0
      %927 = vmatpush1.bf16.msra.mxu0 %v817
      %928 = vmatprep.subr.bf16.mxu0 0
      %929 = vmatpush1.bf16.msra.mxu0 %v818
      %930 = vmatprep.subr.bf16.mxu0 0
      %931 = vmatpush1.bf16.msra.mxu0 %v819
      %932 = vmatprep.mubr.bf16.mxu0 %v601
      %933 = vmatmul.mubr.bf16.gmra.mrb[0].mxu0 %v600
      %v934 = vpop.f32.mrb[0].mxu0
      %v935 = vadd.f32 %v484, %v934
      %v936 = vpop.f32.mrb[0].mxu0
      %v937 = vpop.f32.mrb[0].mxu0
      %v938 = vadd.f32 %v485, %v937
      %v939 = vpop.f32.mrb[0].mxu0
      %940 = vdwg.mxu0
      %941 = vmatprep.subr.bf16.mxu0 0
      %942 = vmatpush1.bf16.msra.mxu0 %v820
      %943 = vmatprep.subr.bf16.mxu0 0
      %944 = vmatpush1.bf16.msra.mxu0 %v821
      %945 = vmatprep.subr.bf16.mxu0 0
      %946 = vmatpush1.bf16.msra.mxu0 %v822
      %947 = vmatprep.subr.bf16.mxu0 0
      %948 = vmatpush1.bf16.msra.mxu0 %v823
      %949 = vmatprep.subr.bf16.mxu0 0
      %950 = vmatpush1.bf16.msra.mxu0 %v824
      %951 = vmatprep.subr.bf16.mxu0 0
      %952 = vmatpush1.bf16.msra.mxu0 %v825
      %953 = vmatprep.subr.bf16.mxu0 0
      %954 = vmatpush1.bf16.msra.mxu0 %v826
      %955 = vmatprep.subr.bf16.mxu0 0
      %956 = vmatpush1.bf16.msra.mxu0 %v827
      %957 = vmatprep.subr.bf16.mxu0 0
      %958 = vmatpush1.bf16.msra.mxu0 %v828
      %959 = vmatprep.subr.bf16.mxu0 0
      %960 = vmatpush1.bf16.msra.mxu0 %v829
      %961 = vmatprep.subr.bf16.mxu0 0
      %962 = vmatpush1.bf16.msra.mxu0 %v830
      %963 = vmatprep.subr.bf16.mxu0 0
      %964 = vmatpush1.bf16.msra.mxu0 %v831
      %965 = vmatprep.subr.bf16.mxu0 0
      %966 = vmatpush1.bf16.msra.mxu0 %v832
      %967 = vmatprep.subr.bf16.mxu0 0
      %968 = vmatpush1.bf16.msra.mxu0 %v833
      %969 = vmatprep.subr.bf16.mxu0 0
      %970 = vmatpush1.bf16.msra.mxu0 %v834
      %971 = vmatprep.subr.bf16.mxu0 0
      %972 = vmatpush1.bf16.msra.mxu0 %v835
      %973 = vmatprep.mubr.bf16.mxu0 %v603
      %974 = vmatmul.mubr.bf16.gmra.mrb[0].mxu0 %v602
      %v975 = vpop.f32.mrb[0].mxu0
      %v976 = vadd.f32 %v935, %v975
      %v977 = vpop.f32.mrb[0].mxu0
      %v978 = vpop.f32.mrb[0].mxu0
      %v979 = vadd.f32 %v938, %v978
      %v980 = vpop.f32.mrb[0].mxu0
      %981 = vdwg.mxu0
      %982 = vmatprep.subr.bf16.mxu0 0
      %983 = vmatpush1.bf16.msra.mxu0 %v836
      %984 = vmatprep.subr.bf16.mxu0 0
      %985 = vmatpush1.bf16.msra.mxu0 %v837
      %986 = vmatprep.subr.bf16.mxu0 0
      %987 = vmatpush1.bf16.msra.mxu0 %v838
      %988 = vmatprep.subr.bf16.mxu0 0
      %989 = vmatpush1.bf16.msra.mxu0 %v839
      %990 = vmatprep.subr.bf16.mxu0 0
      %991 = vmatpush1.bf16.msra.mxu0 %v840
      %992 = vmatprep.subr.bf16.mxu0 0
      %993 = vmatpush1.bf16.msra.mxu0 %v841
      %994 = vmatprep.subr.bf16.mxu0 0
      %995 = vmatpush1.bf16.msra.mxu0 %v842
      %996 = vmatprep.subr.bf16.mxu0 0
      %997 = vmatpush1.bf16.msra.mxu0 %v843
      %998 = vmatprep.subr.bf16.mxu0 0
      %999 = vmatpush1.bf16.msra.mxu0 %v844
      %1000 = vmatprep.subr.bf16.mxu0 0
      %1001 = vmatpush1.bf16.msra.mxu0 %v845
      %1002 = vmatprep.subr.bf16.mxu0 0
      %1003 = vmatpush1.bf16.msra.mxu0 %v846
      %1004 = vmatprep.subr.bf16.mxu0 0
      %1005 = vmatpush1.bf16.msra.mxu0 %v847
      %1006 = vmatprep.subr.bf16.mxu0 0
      %1007 = vmatpush1.bf16.msra.mxu0 %v848
      %1008 = vmatprep.subr.bf16.mxu0 0
      %1009 = vmatpush1.bf16.msra.mxu0 %v849
      %1010 = vmatprep.subr.bf16.mxu0 0
      %1011 = vmatpush1.bf16.msra.mxu0 %v850
      %1012 = vmatprep.subr.bf16.mxu0 0
      %1013 = vmatpush1.bf16.msra.mxu0 %v851
      %1014 = vmatprep.mubr.bf16.mxu0 %v605
      %1015 = vmatmul.mubr.bf16.gmra.mrb[0].mxu0 %v604
      %v1016 = vpop.f32.mrb[0].mxu0
      %v1017 = vadd.f32 %v976, %v1016
      %v1018 = vpop.f32.mrb[0].mxu0
      %v1019 = vpop.f32.mrb[0].mxu0
      %v1020 = vadd.f32 %v979, %v1019
      %v1021 = vpop.f32.mrb[0].mxu0
      %1022 = vdwg.mxu0
      %v1023 = vld [vmem:[%s4] sm:$0x1]
      %v1025 = vlaneseq
      %v1026 = vshrl.u32 %v1025, 7
      %v1027 = vsub.s32 0, %v1026
      %v1028 = vrot.slane %v1023, %v1027
      %v1030 = vadd.f32 %v1017, %v1028
      %v1031 = vadd.f32 %v1020, %v1028
      %v1032 = vlaneseq
      %v1033 = vand.u32 %v1032, 127
      %vm1034 = vcmp.lt.s32.totalorder %v1033, 8
      %v1035 = vsel %vm1034, %v1030, -1e+30
      %v1036 = vsel %vm1034, %v1031, -1e+30
      %vm1037 = vcmask 130048
      %v1038 = vsel %vm1037, %v1035, -inf
      %1039 = vmax.xlane.f32.xlu0 %v1038
      %v1040 = vpop.xlane.xlu0 %1039
      %v1041 = vsel %vm1037, %v1036, -inf
      %1042 = vmax.xlane.f32.xlu0 %v1041
      %v1043 = vpop.xlane.xlu0 %1042
      %v1044 = vsub.f32 %v1035, %v1040
      %v1045 = vsub.f32 %v1036, %v1043
      %v1046 = vmul.f32 %v1044, 1.442695
      %v1047 = vpow.pop %v1046
      %v1048 = vmul.f32 %v1045, 1.442695
      %v1049 = vpow.pop %v1048
      %v1050 = vsel %vm1037, %v1047, 0.0
      %1051 = vadd.xlane.f32.xlu0 %v1050
      %v1052 = vpop.xlane.xlu0 %1051
      %v1053 = vsel %vm1037, %v1049, 0.0
      %1054 = vadd.xlane.f32.xlu0 %v1053
      %v1055 = vpop.xlane.xlu0 %1054
      %v1056 = vlog2.pop %v1052
      %v1057 = vmul.f32 %v1056, 0.6931472
      %v1058 = vlog2.pop %v1055
      %v1059 = vmul.f32 %v1058, 0.6931472
      %v1060 = vadd.f32 %v1040, %v1057
      %v1061 = vadd.f32 %v1043, %v1059
      %1062 = vset.pattern.permute.xlu0 0
      %1063 = vperm.xlu0 %1062, %v311
      %v1064 = vpop.permute.xlu0 %1063
      %1065 = vset.pattern.permute.xlu0 0
      %1066 = vperm.xlu0 %1065, %v312
      %v1067 = vpop.permute.xlu0 %1066
      %vm1068 = vcmp.eq.s32.totalorder %v1033, %v1064
      %vm1069 = vcmp.eq.s32.totalorder %v1033, %v1067
      %v1070 = vsel %vm1068, %v1035, 0.0
      %v1071 = vsel %vm1069, %v1036, 0.0
      %v1072 = vsel %vm1037, %v1070, 0.0
      %1073 = vadd.xlane.f32.xlu0 %v1072
      %v1074 = vpop.xlane.xlu0 %1073
      %v1075 = vsel %vm1037, %v1071, 0.0
      %1076 = vadd.xlane.f32.xlu0 %v1075
      %v1077 = vpop.xlane.xlu0 %1076
      %v1078 = vsub.f32 %v1060, %v1074
      %v1079 = vsub.f32 %v1061, %v1077
      %vm1080 = vcmp.eq.f32.partialorder %v1035, %v1040
      %vm1081 = vcmp.eq.f32.partialorder %v1036, %v1043
      %v1082 = vsel %vm1080, %v1033, 16
      %v1083 = vsel %vm1081, %v1033, 16
      %v1084 = vsel %vm1037, %v1082, 2147483647
      %v1085 = vand.u32 %v1084, 65535
      %v1086 = vshra.s32 %v1084, 16
      %v1087 = vcvt.s32.f32 %v1085
      %v1088 = vcvt.s32.f32 %v1086
      %1089 = vmin.xlane.f32.xlu0 %v1088
      %v1090 = vpop.xlane.xlu0 %1089
      %vm1091 = vcmp.eq.f32.partialorder %v1088, %v1090
      %v1092 = vsel %vm1091, %v1087, inf
      %1093 = vmin.xlane.f32.xlu0 %v1092
      %v1094 = vpop.xlane.xlu0 %1093
      %v1095 = vcvt.f32.s32 %v1094
      %v1096 = vcvt.f32.s32 %v1090
      %v1097 = vshll.u32 %v1096, 16
      %v1098 = vadd.s32 %v1097, %v1095
      %v1099 = vsel %vm1037, %v1083, 2147483647
      %v1100 = vand.u32 %v1099, 65535
      %v1101 = vshra.s32 %v1099, 16
      %v1102 = vcvt.s32.f32 %v1100
      %v1103 = vcvt.s32.f32 %v1101
      %1104 = vmin.xlane.f32.xlu0 %v1103
      %v1105 = vpop.xlane.xlu0 %1104
      %vm1106 = vcmp.eq.f32.partialorder %v1103, %v1105
      %v1107 = vsel %vm1106, %v1102, inf
      %1108 = vmin.xlane.f32.xlu0 %v1107
      %v1109 = vpop.xlane.xlu0 %1108
      %v1110 = vcvt.f32.s32 %v1109
      %v1111 = vcvt.f32.s32 %v1105
      %v1112 = vshll.u32 %v1111, 16
      %v1113 = vadd.s32 %v1112, %v1110
      %v1114 = vcvt.s32.f32 %v1098
      %v1115 = vcvt.s32.f32 %v1113
      %vm1116 = vcmp.eq.s32.totalorder %v1033, 8
      %v1117 = vsel %vm1116, %v1078, %v1030
      %v1118 = vsel %vm1116, %v1079, %v1031
      %vm1119 = vcmp.eq.s32.totalorder %v1033, 9
      %v1120 = vsel %vm1119, %v1114, %v1117
      %v1121 = vsel %vm1119, %v1115, %v1118
      %1122 = vst.msk [vmem:[%s300] sm:$0xff] %vm1037, %v1120
      %1123 = vst.msk [vmem:[%s300 + $0x8] sm:$0xff] %vm1037, %v1121
      %s1124 = smul.u32 2, %s17
      %p1125 = scmp.lt.s32.totalorder %s1124, 3
      %s1126 = scalar_select %p1125, %s1124, 3
      %s1127 = smul.addr %s1126, 8
      %s1128 = scalar_lea.vmem %s6, %s1127
      // Predicated region
      $region45: #{tpu_custom_call.1} parent=43 // pred_check
        %p1129 = pneg %p176
      $region46: #{tpu_custom_call.1} parent=43 // pred_check_branch
        %1131 = sbr.rel (%p1129) target = $region48
      $region47: #{tpu_custom_call.1} parent=43 // pred_region
        %s1132 = smul.u32 2, %s17
      $region48: #{tpu_custom_call.1} parent=43 // pred_fallthru
        _
    $region44: #{tpu_custom_call.1} parent=5 // pred_fallthru
      _
    %p1133 = scmp.le.s32.totalorder 2, %s12
    // Predicated region
    $region49: #{tpu_custom_call.1} parent=5 // pred_check
      %p1134 = pneg %p1133
    $region50: #{tpu_custom_call.1} parent=5 // pred_check_branch
      %1136 = sbr.rel (%p1134) target = $region52
    $region51: #{tpu_custom_call.1} parent=5 // pred_region
      %s1137 = ssub.s32 %s12, 2
      // Predicated region
      $region53: #{tpu_custom_call.1} parent=51 // pred_check
        %p1138 = pneg %p182
      $region54: #{tpu_custom_call.1} parent=51 // pred_check_branch
        %1140 = sbr.rel (%p1138) target = $region56
      $region55: #{tpu_custom_call.1} parent=51 // pred_region
        %s1141 = smul.u32 2, %s18
        %p1142 = scmp.lt.s32.totalorder %s1141, 3
        %s1143 = scalar_select %p1142, %s1141, 3
        %s1144 = smul.addr %s1143, 8
        %s1145 = scalar_lea.vmem %s6, %s1144
      $region56: #{tpu_custom_call.1} parent=51 // pred_fallthru
        _
    $region52: #{tpu_custom_call.1} parent=5 // pred_fallthru
      _
  $region6: #{tpu_custom_call.1} parent=0 // loop_footer
    %s16 = sadd.s32 1, %s12
  $region7: #{tpu_custom_call.1} parent=0 // loop_footer_branch
    %11 = sbr.rel target = $region3
  $region8: #{tpu_custom_call.1} parent=0 // loop_exit
    _

</llo_original>
